<compile_context>
chip_gen: v7x
topology: tpu7x:2x2x1
jax: 0.10.0
libtpu: 0.0.40
codegen_flags: <defaults>
</compile_context>

<pallas_src>
import jax
import jax.numpy as jnp
from jax.experimental import pallas as pl
from jax.experimental.pallas import tpu as pltpu


def _round_up(x, m):
    return ((x + m - 1) // m) * m


def _recon_kernel(x1_ref, x2_ref, x3_ref,
                  w1t_ref, w2t_ref, w3t_ref, b_ref,
                  o_ref):
    # Folded forward: out = Wc1^T @ x1 + Wc2^T @ x2 + Wc3^T @ x3 + b_total.
    acc = jnp.dot(w1t_ref[...], x1_ref[...], preferred_element_type=jnp.float32)
    acc = acc + jnp.dot(w2t_ref[...], x2_ref[...],
                        preferred_element_type=jnp.float32)
    acc = acc + jnp.dot(w3t_ref[...], x3_ref[...],
                        preferred_element_type=jnp.float32)
    o_ref[...] = (acc + b_ref[...]).astype(o_ref.dtype)


def reconstruction_head_forward(x1, x2, x3, params, *, tile=2048,
                                compute_dtype=jnp.float32):
    """x1/x2/x3: NCHW float32 tensors of shape [N-1, C_gX, H, W].

    compute_dtype: set to jnp.bfloat16 on v6e/v7x for ~2x mem-bound speedup
    (accumulation stays f32 via preferred_element_type).
    """
    n, c1, h, w = x1.shape
    c2 = x2.shape[1]
    c3 = x3.shape[1]
    (w1, b1), (w2, b2), (w3, b3), (wf, bf) = params
    c_enc = w1.shape[1]
    c_out = wf.shape[1]
    hw = h * w

    # ---- Fold the linear chain offline (tiny host-side matmuls). ----------
    wf1 = wf[:c_enc]
    wf2 = wf[c_enc:2 * c_enc]
    wf3 = wf[2 * c_enc:]
    wc1_t = (w1 @ wf1).T.astype(compute_dtype)          # [c_out, c1]
    wc2_t = (w2 @ wf2).T.astype(compute_dtype)          # [c_out, c2]
    wc3_t = (w3 @ wf3).T.astype(compute_dtype)          # [c_out, c3]
    b_total = (b1 @ wf1 + b2 @ wf2 + b3 @ wf3 + bf)     # [c_out]
    b_2d = b_total.reshape(c_out, 1).astype(jnp.float32)

    # ---- Channel-major flatten (free reshape, no transpose). --------------
    def to_cmajor(x):
        return x.reshape(x.shape[0], x.shape[1], hw).astype(compute_dtype)

    f1, f2, f3 = to_cmajor(x1), to_cmajor(x2), to_cmajor(x3)

    # Lane tile: multiple of 128, large enough to amortize per-step overhead.
    tile_p = min(tile, _round_up(hw, 128))
    hw_pad = _round_up(hw, tile_p)
    if hw_pad != hw:
        pad = ((0, 0), (0, 0), (0, hw_pad - hw))
        f1 = jnp.pad(f1, pad)
        f2 = jnp.pad(f2, pad)
        f3 = jnp.pad(f3, pad)

    grid = (n, hw_pad // tile_p)

    def x_spec(c):
        # Batch dim squeezed; kernel sees a [c, tile_p] block (lane-dense).
        return pl.BlockSpec((None, c, tile_p), lambda b, t: (b, 0, t))

    def full_spec(r, c):
        return pl.BlockSpec((r, c), lambda b, t: (0, 0))

    out = pl.pallas_call(
        _recon_kernel,
        out_shape=jax.ShapeDtypeStruct((n, c_out, hw_pad), jnp.float32),
        grid_spec=pltpu.PrefetchScalarGridSpec(
            num_scalar_prefetch=0,
            grid=grid,
            in_specs=[
                x_spec(c1), x_spec(c2), x_spec(c3),
                full_spec(c_out, c1), full_spec(c_out, c2),
                full_spec(c_out, c3), full_spec(c_out, 1),
            ],
            out_specs=pl.BlockSpec((None, c_out, tile_p),
                                   lambda b, t: (b, 0, t)),
        ),
        compiler_params=pltpu.CompilerParams(
            dimension_semantics=("parallel", "parallel")),
    )(f1, f2, f3, wc1_t, wc2_t, wc3_t, b_2d)

    # Drop spatial padding; output is already NCHW.
    return out[:, :, :hw].reshape(n, c_out, h, w)


def init_params(key, c_g1, c_g2, c_g3, c_enc, c_out):
    ks = jax.random.split(key, 8)
    scale = 0.05
    w1 = scale * jax.random.normal(ks[0], (c_g1, c_enc), jnp.float32)
    b1 = scale * jax.random.normal(ks[1], (c_enc,), jnp.float32)
    w2 = scale * jax.random.normal(ks[2], (c_g2, c_enc), jnp.float32)
    b2 = scale * jax.random.normal(ks[3], (c_enc,), jnp.float32)
    w3 = scale * jax.random.normal(ks[4], (c_g3, c_enc), jnp.float32)
    b3 = scale * jax.random.normal(ks[5], (c_enc,), jnp.float32)
    wf = scale * jax.random.normal(ks[6], (3 * c_enc, c_out), jnp.float32)
    bf = scale * jax.random.normal(ks[7], (c_out,), jnp.float32)
    return (w1, b1), (w2, b2), (w3, b3), (wf, bf)


def _reference(x1, x2, x3, params):
    """Pure-JAX reference of the PyTorch forward (1x1 convs as matmuls)."""
    (w1, b1), (w2, b2), (w3, b3), (wf, bf) = params

    def conv1x1(x, w, b):
        y = jnp.einsum('nchw,cd->ndhw', x, w)
        return y + b[None, :, None, None]

    e1 = conv1x1(x1, w1, b1)
    e2 = conv1x1(x2, w2, b2)
    e3 = conv1x1(x3, w3, b3)
    cat = jnp.concatenate([e1, e2, e3], axis=1)
    return conv1x1(cat, wf, bf)


if __name__ == "__main__":
    key = jax.random.PRNGKey(0)
    k1, k2, k3, kp = jax.random.split(key, 4)

    n_minus_1 = 2          # collaborating agents
    h = w = 16
    c_g1, c_g2, c_g3 = 4, 8, 16
    c_enc, c_out = 32, 64

    x1 = jax.random.normal(k1, (n_minus_1, c_g1, h, w), jnp.float32)
    x2 = jax.random.normal(k2, (n_minus_1, c_g2, h, w), jnp.float32)
    x3 = jax.random.normal(k3, (n_minus_1, c_g3, h, w), jnp.float32)

    params = init_params(kp, c_g1, c_g2, c_g3, c_enc, c_out)

    out = reconstruction_head_forward(x1, x2, x3, params)
    out = jax.block_until_ready(out)

    ref = _reference(x1, x2, x3, params)
    assert out.shape == (n_minus_1, c_out, h, w), out.shape
    assert jnp.allclose(out, ref, atol=1e-4, rtol=1e-4), \
        float(jnp.max(jnp.abs(out - ref)))

    print("KERNEL_OK")
</pallas_src>

<mosaic_0001>
module attributes {stable_mosaic.version = 11 : i64} {
  func.func @_recon_kernel(%arg0: i32, %arg1: i32, %arg2: memref<1x4x256xf32, #tpu.memory_space<vmem>>, %arg3: memref<1x8x256xf32, #tpu.memory_space<vmem>>, %arg4: memref<1x16x256xf32, #tpu.memory_space<vmem>>, %arg5: memref<64x4xf32, #tpu.memory_space<vmem>>, %arg6: memref<64x8xf32, #tpu.memory_space<vmem>>, %arg7: memref<64x16xf32, #tpu.memory_space<vmem>>, %arg8: memref<64x1xf32, #tpu.memory_space<vmem>>, %arg9: memref<1x64x256xf32, #tpu.memory_space<vmem>>) attributes {dimension_semantics = [#tpu.dimension_semantics<parallel>, #tpu.dimension_semantics<parallel>], iteration_bounds = array<i64: 2, 1>, scalar_prefetch = 0 : i64, scratch_operands = 0 : i64, tpu.core_type = #tpu.core_type<tc>, window_params = [{transform_indices = @transform_0, window_bounds = array<i64: 1, 4, 256>}, {transform_indices = @transform_1, window_bounds = array<i64: 1, 8, 256>}, {transform_indices = @transform_2, window_bounds = array<i64: 1, 16, 256>}, {pipeline_mode = #tpu.pipeline_mode<synchronous>, transform_indices = @transform_3, window_bounds = array<i64: 64, 4>}, {pipeline_mode = #tpu.pipeline_mode<synchronous>, transform_indices = @transform_4, window_bounds = array<i64: 64, 8>}, {pipeline_mode = #tpu.pipeline_mode<synchronous>, transform_indices = @transform_5, window_bounds = array<i64: 64, 16>}, {pipeline_mode = #tpu.pipeline_mode<synchronous>, transform_indices = @transform_6, window_bounds = array<i64: 64, 1>}, {transform_indices = @transform_7, window_bounds = array<i64: 1, 64, 256>}]} {
    %c0 = arith.constant 0 : index
    %c0_0 = arith.constant 0 : index
    %0 = vector.load %arg5[%c0, %c0_0] : memref<64x4xf32, #tpu.memory_space<vmem>>, vector<64x4xf32>
    %c0_1 = arith.constant 0 : index
    %c0_2 = arith.constant 0 : index
    %c0_3 = arith.constant 0 : index
    %1 = vector.load %arg2[%c0_1, %c0_2, %c0_3] : memref<1x4x256xf32, #tpu.memory_space<vmem>>, vector<1x4x256xf32>
    %2 = vector.shape_cast %1 : vector<1x4x256xf32> to vector<4x256xf32>
    %cst = arith.constant dense<0.000000e+00> : vector<64x256xf32>
    %3 = tpu.matmul %0, %2, %cst {dimension_numbers = #tpu.dot_dimension_numbers<[1], [0], [0], [1], [0, 0, 1, 1], [], []>} : vector<64x4xf32>, vector<4x256xf32>, vector<64x256xf32> -> vector<64x256xf32>
    %c0_4 = arith.constant 0 : index
    %c0_5 = arith.constant 0 : index
    %4 = vector.load %arg6[%c0_4, %c0_5] : memref<64x8xf32, #tpu.memory_space<vmem>>, vector<64x8xf32>
    %c0_6 = arith.constant 0 : index
    %c0_7 = arith.constant 0 : index
    %c0_8 = arith.constant 0 : index
    %5 = vector.load %arg3[%c0_6, %c0_7, %c0_8] : memref<1x8x256xf32, #tpu.memory_space<vmem>>, vector<1x8x256xf32>
    %6 = vector.shape_cast %5 : vector<1x8x256xf32> to vector<8x256xf32>
    %cst_9 = arith.constant dense<0.000000e+00> : vector<64x256xf32>
    %7 = tpu.matmul %4, %6, %cst_9 {dimension_numbers = #tpu.dot_dimension_numbers<[1], [0], [0], [1], [0, 0, 1, 1], [], []>} : vector<64x8xf32>, vector<8x256xf32>, vector<64x256xf32> -> vector<64x256xf32>
    %8 = arith.addf %3, %7 : vector<64x256xf32>
    %c0_10 = arith.constant 0 : index
    %c0_11 = arith.constant 0 : index
    %9 = vector.load %arg7[%c0_10, %c0_11] : memref<64x16xf32, #tpu.memory_space<vmem>>, vector<64x16xf32>
    %c0_12 = arith.constant 0 : index
    %c0_13 = arith.constant 0 : index
    %c0_14 = arith.constant 0 : index
    %10 = vector.load %arg4[%c0_12, %c0_13, %c0_14] : memref<1x16x256xf32, #tpu.memory_space<vmem>>, vector<1x16x256xf32>
    %11 = vector.shape_cast %10 : vector<1x16x256xf32> to vector<16x256xf32>
    %cst_15 = arith.constant dense<0.000000e+00> : vector<64x256xf32>
    %12 = tpu.matmul %9, %11, %cst_15 {dimension_numbers = #tpu.dot_dimension_numbers<[1], [0], [0], [1], [0, 0, 1, 1], [], []>} : vector<64x16xf32>, vector<16x256xf32>, vector<64x256xf32> -> vector<64x256xf32>
    %13 = arith.addf %8, %12 : vector<64x256xf32>
    %c0_16 = arith.constant 0 : index
    %c0_17 = arith.constant 0 : index
    %14 = vector.load %arg8[%c0_16, %c0_17] : memref<64x1xf32, #tpu.memory_space<vmem>>, vector<64x1xf32>
    %15 = vector.broadcast %14 : vector<64x1xf32> to vector<64x256xf32>
    %16 = arith.addf %13, %15 : vector<64x256xf32>
    %c0_18 = arith.constant 0 : index
    %c0_19 = arith.constant 0 : index
    %c0_20 = arith.constant 0 : index
    %17 = vector.load %arg9[%c0_18, %c0_19, %c0_20] : memref<1x64x256xf32, #tpu.memory_space<vmem>>, vector<1x64x256xf32>
    %18 = vector.shape_cast %17 : vector<1x64x256xf32> to vector<64x256xf32>
    %19 = vector.shape_cast %16 : vector<64x256xf32> to vector<1x64x256xf32>
    tpu.vector_store %arg9[%c0_18, %c0_19, %c0_20], %19 {strides = array<i32>} : memref<1x64x256xf32, #tpu.memory_space<vmem>>, vector<1x64x256xf32>,
    return
  }
  func.func @transform_0(%arg0: i32, %arg1: i32) -> (i32, i32, i32) {
    %c0_i32 = arith.constant 0 : i32
    %c0_i32_0 = arith.constant 0 : i32
    return %arg0, %c0_i32, %arg1 : i32, i32, i32
  }
  func.func @transform_1(%arg0: i32, %arg1: i32) -> (i32, i32, i32) {
    %c0_i32 = arith.constant 0 : i32
    %c0_i32_0 = arith.constant 0 : i32
    return %arg0, %c0_i32, %arg1 : i32, i32, i32
  }
  func.func @transform_2(%arg0: i32, %arg1: i32) -> (i32, i32, i32) {
    %c0_i32 = arith.constant 0 : i32
    %c0_i32_0 = arith.constant 0 : i32
    return %arg0, %c0_i32, %arg1 : i32, i32, i32
  }
  func.func @transform_3(%arg0: i32, %arg1: i32) -> (i32, i32) {
    %c0_i32 = arith.constant 0 : i32
    %c0_i32_0 = arith.constant 0 : i32
    %c0_i32_1 = arith.constant 0 : i32
    return %c0_i32, %c0_i32_0 : i32, i32
  }
  func.func @transform_4(%arg0: i32, %arg1: i32) -> (i32, i32) {
    %c0_i32 = arith.constant 0 : i32
    %c0_i32_0 = arith.constant 0 : i32
    %c0_i32_1 = arith.constant 0 : i32
    return %c0_i32, %c0_i32_0 : i32, i32
  }
  func.func @transform_5(%arg0: i32, %arg1: i32) -> (i32, i32) {
    %c0_i32 = arith.constant 0 : i32
    %c0_i32_0 = arith.constant 0 : i32
    %c0_i32_1 = arith.constant 0 : i32
    return %c0_i32, %c0_i32_0 : i32, i32
  }
  func.func @transform_6(%arg0: i32, %arg1: i32) -> (i32, i32) {
    %c0_i32 = arith.constant 0 : i32
    %c0_i32_0 = arith.constant 0 : i32
    %c0_i32_1 = arith.constant 0 : i32
    return %c0_i32, %c0_i32_0 : i32, i32
  }
  func.func @transform_7(%arg0: i32, %arg1: i32) -> (i32, i32, i32) {
    %c0_i32 = arith.constant 0 : i32
    %c0_i32_0 = arith.constant 0 : i32
    return %arg0, %c0_i32, %arg1 : i32, i32, i32
  }
}

</mosaic_0001>

<llo_original>
// kernel: tpu_custom_call.1
$region0: #{tpu_custom_call.1}
  #allocation0 [shape = 'u32[]', space=smem, size = 0x4, offset = 0x4, fixed_abs, tag = 'smem constant byte address 0x4 - core index']
  #allocation1 [shape = 'u32[144,128]{1,0:T(1,128)}', space=vmem, size = 0x12000, scoped, tag = 'internal scratch']
  %s0 = inlined_call_operand.vmem [shape: f32[2,4,256], index: 0, kind: input, shape index: {}]
  %s1 = inlined_call_operand.vmem [shape: f32[2,8,256], index: 1, kind: input, shape index: {}]
  %s2 = inlined_call_operand.vmem [shape: f32[2,16,256], index: 2, kind: input, shape index: {}]
  %s3 = inlined_call_operand.vmem [shape: f32[64,4], index: 3, kind: input, shape index: {}]
  %s4 = inlined_call_operand.vmem [shape: f32[64,8], index: 4, kind: input, shape index: {}]
  %s5 = inlined_call_operand.vmem [shape: f32[64,16], index: 5, kind: input, shape index: {}]
  %s6 = inlined_call_operand.vmem [shape: f32[64,1], index: 6, kind: input, shape index: {}]
  %s7 = inlined_call_operand.hbm [shape: f32[2,64,256], index: 7, kind: output, shape index: {}]
  %s8 = sld [smem:[#allocation0]]
  $region61: #{tpu_custom_call.1} parent=0
    _
  %s10 = ssub.s32 1, %s8
  %s11 = scalar_select 0, %s10, %s8
  $region1: #{tpu_custom_call.1} parent=0
    #allocation2 [shape = 'u8[131072]{0}', space=vmem, size = 0x20000, scoped, tag = 'output window, operand 0']
    #allocation3 [shape = 's32[2]{0}', space=sflag, size = 0x8, scoped, tag = 'scoped memory for tpu_custom_call.1']
    %12 = vsyncpa [#allocation3], 0
    %s13 = scalar_lea.sflag [#allocation3], 1
    %14 = vsyncpa %s13, 0
    loop: start=0, step=1, limit=4
    $region2: #{tpu_custom_call.1} parent=1 // loop_pre_header
      _
    $region3: #{tpu_custom_call.1} parent=1 // loop_header
      %s16 = sphi 0, %s20
      %p17 = scmp.ge.s32.totalorder %s16, 4
      %s23 = sphi 0, %s35
      %s24 = sphi 0, %s31
      %s25 = sphi 0, %s23
      %s26 = sphi 0, %s24
      %s27 = sphi 0, %s25
      %s28 = sphi 0, %s26
      %s40 = sphi 0, %s42
      %s43 = sphi 0, %s40
      %s44 = sphi 0, %s43
      %s60 = sphi 0, %s44
      %s68 = sphi 0, %s70
      %s71 = sphi 0, %s68
      %s72 = sphi 0, %s71
      %s88 = sphi 0, %s72
      %s96 = sphi 0, %s98
      %s99 = sphi 0, %s96
      %s100 = sphi 0, %s99
      %s116 = sphi 0, %s100
      %s120 = sphi 0, %s120
      %s122 = sphi 0, %s120
      %s123 = sphi 0, %s122
      %s137 = sphi 0, %s123
      %s141 = sphi 0, %s141
      %s143 = sphi 0, %s141
      %s144 = sphi 0, %s143
      %s158 = sphi 0, %s144
      %s162 = sphi 0, %s162
      %s164 = sphi 0, %s162
      %s165 = sphi 0, %s164
      %s179 = sphi 0, %s165
      %s183 = sphi 0, %s183
      %s185 = sphi 0, %s183
      %s186 = sphi 0, %s185
      %s200 = sphi 0, %s186
      %s208 = sphi 0, %s210
      %s211 = sphi 0, %s208
      %s212 = sphi 0, %s211
      %s228 = sphi 0, %s212
    $region4: #{tpu_custom_call.1} parent=1 // loop_header_branch
      %19 = sbr.rel (%p17) target = $region8
    $region5: #{tpu_custom_call.1} parent=1 // loop_body
      %s21 = ssub.s32 %s16, 1
      %s22 = ssub.s32 %s16, 2
      %s29 = sadd.s32 1, %s24
      %p30 = scmp.ge.s32.totalorder %s29, 1
      %s31 = scalar_select %p30, 0, %s29
      %s32 = sadd.s32 1, %s23
      %s33 = scalar_select %p30, %s32, %s23
      %p34 = scmp.ge.s32.totalorder %s33, 2
      %s35 = scalar_select %p34, 0, %s33
      %s36 = ssub.s32 %s23, %s35
      %s37 = ssub.s32 %s24, %s31
      %s38 = sor.u32 %s36, %s37
      %p39 = scmp.eq.s32.totalorder %s38, 0
      %s41 = sadd.s32 %s40, 1
      %s42 = scalar_select %p39, %s40, %s41
      %p45 = pneg %p39
      %p46 = scmp.eq.s32.totalorder %s16, 1
      %p47 = por %p45, %p46
      %p48 = scmp.ne.s32.totalorder %s40, %s43
      %p49 = scmp.eq.s32.totalorder %s16, 0
      %p50 = por %p48, %p49
      %p51 = scmp.ne.s32.totalorder %s40, %s43
      %p52 = scmp.eq.s32.totalorder %s21, 1
      %p53 = por %p51, %p52
      %p54 = scmp.ne.s32.totalorder %s43, %s44
      %p55 = scmp.eq.s32.totalorder %s21, 0
      %p56 = por %p54, %p55
      %p57 = scmp.ne.s32.totalorder %s43, %s44
      %p58 = scmp.eq.s32.totalorder %s22, 1
      %p59 = por %p57, %p58
      %p61 = scmp.ne.s32.totalorder %s44, %s60
      %p62 = scmp.eq.s32.totalorder %s22, 0
      %p63 = por %p61, %p62
      %s64 = ssub.s32 %s23, %s35
      %s65 = ssub.s32 %s24, %s31
      %s66 = sor.u32 %s64, %s65
      %p67 = scmp.eq.s32.totalorder %s66, 0
      %s69 = sadd.s32 %s68, 1
      %s70 = scalar_select %p67, %s68, %s69
      %p73 = pneg %p67
      %p74 = scmp.eq.s32.totalorder %s16, 1
      %p75 = por %p73, %p74
      %p76 = scmp.ne.s32.totalorder %s68, %s71
      %p77 = scmp.eq.s32.totalorder %s16, 0
      %p78 = por %p76, %p77
      %p79 = scmp.ne.s32.totalorder %s68, %s71
      %p80 = scmp.eq.s32.totalorder %s21, 1
      %p81 = por %p79, %p80
      %p82 = scmp.ne.s32.totalorder %s71, %s72
      %p83 = scmp.eq.s32.totalorder %s21, 0
      %p84 = por %p82, %p83
      %p85 = scmp.ne.s32.totalorder %s71, %s72
      %p86 = scmp.eq.s32.totalorder %s22, 1
      %p87 = por %p85, %p86
      %p89 = scmp.ne.s32.totalorder %s72, %s88
      %p90 = scmp.eq.s32.totalorder %s22, 0
      %p91 = por %p89, %p90
      %s92 = ssub.s32 %s23, %s35
      %s93 = ssub.s32 %s24, %s31
      %s94 = sor.u32 %s92, %s93
      %p95 = scmp.eq.s32.totalorder %s94, 0
      %s97 = sadd.s32 %s96, 1
      %s98 = scalar_select %p95, %s96, %s97
      %p101 = pneg %p95
      %p102 = scmp.eq.s32.totalorder %s16, 1
      %p103 = por %p101, %p102
      %p104 = scmp.ne.s32.totalorder %s96, %s99
      %p105 = scmp.eq.s32.totalorder %s16, 0
      %p106 = por %p104, %p105
      %p107 = scmp.ne.s32.totalorder %s96, %s99
      %p108 = scmp.eq.s32.totalorder %s21, 1
      %p109 = por %p107, %p108
      %p110 = scmp.ne.s32.totalorder %s99, %s100
      %p111 = scmp.eq.s32.totalorder %s21, 0
      %p112 = por %p110, %p111
      %p113 = scmp.ne.s32.totalorder %s99, %s100
      %p114 = scmp.eq.s32.totalorder %s22, 1
      %p115 = por %p113, %p114
      %p117 = scmp.ne.s32.totalorder %s100, %s116
      %p118 = scmp.eq.s32.totalorder %s22, 0
      %p119 = por %p117, %p118
      %s121 = sadd.s32 %s120, 1
      %p124 = scmp.eq.s32.totalorder %s16, 1
      %p125 = scmp.ne.s32.totalorder %s120, %s122
      %p126 = scmp.eq.s32.totalorder %s16, 0
      %p127 = por %p125, %p126
      %p128 = scmp.ne.s32.totalorder %s120, %s122
      %p129 = scmp.eq.s32.totalorder %s21, 1
      %p130 = por %p128, %p129
      %p131 = scmp.ne.s32.totalorder %s122, %s123
      %p132 = scmp.eq.s32.totalorder %s21, 0
      %p133 = por %p131, %p132
      %p134 = scmp.ne.s32.totalorder %s122, %s123
      %p135 = scmp.eq.s32.totalorder %s22, 1
      %p136 = por %p134, %p135
      %p138 = scmp.ne.s32.totalorder %s123, %s137
      %p139 = scmp.eq.s32.totalorder %s22, 0
      %p140 = por %p138, %p139
      %s142 = sadd.s32 %s141, 1
      %p145 = scmp.eq.s32.totalorder %s16, 1
      %p146 = scmp.ne.s32.totalorder %s141, %s143
      %p147 = scmp.eq.s32.totalorder %s16, 0
      %p148 = por %p146, %p147
      %p149 = scmp.ne.s32.totalorder %s141, %s143
      %p150 = scmp.eq.s32.totalorder %s21, 1
      %p151 = por %p149, %p150
      %p152 = scmp.ne.s32.totalorder %s143, %s144
      %p153 = scmp.eq.s32.totalorder %s21, 0
      %p154 = por %p152, %p153
      %p155 = scmp.ne.s32.totalorder %s143, %s144
      %p156 = scmp.eq.s32.totalorder %s22, 1
      %p157 = por %p155, %p156
      %p159 = scmp.ne.s32.totalorder %s144, %s158
      %p160 = scmp.eq.s32.totalorder %s22, 0
      %p161 = por %p159, %p160
      %s163 = sadd.s32 %s162, 1
      %p166 = scmp.eq.s32.totalorder %s16, 1
      %p167 = scmp.ne.s32.totalorder %s162, %s164
      %p168 = scmp.eq.s32.totalorder %s16, 0
      %p169 = por %p167, %p168
      %p170 = scmp.ne.s32.totalorder %s162, %s164
      %p171 = scmp.eq.s32.totalorder %s21, 1
      %p172 = por %p170, %p171
      %p173 = scmp.ne.s32.totalorder %s164, %s165
      %p174 = scmp.eq.s32.totalorder %s21, 0
      %p175 = por %p173, %p174
      %p176 = scmp.ne.s32.totalorder %s164, %s165
      %p177 = scmp.eq.s32.totalorder %s22, 1
      %p178 = por %p176, %p177
      %p180 = scmp.ne.s32.totalorder %s165, %s179
      %p181 = scmp.eq.s32.totalorder %s22, 0
      %p182 = por %p180, %p181
      %s184 = sadd.s32 %s183, 1
      %p187 = scmp.eq.s32.totalorder %s16, 1
      %p188 = scmp.ne.s32.totalorder %s183, %s185
      %p189 = scmp.eq.s32.totalorder %s16, 0
      %p190 = por %p188, %p189
      %p191 = scmp.ne.s32.totalorder %s183, %s185
      %p192 = scmp.eq.s32.totalorder %s21, 1
      %p193 = por %p191, %p192
      %p194 = scmp.ne.s32.totalorder %s185, %s186
      %p195 = scmp.eq.s32.totalorder %s21, 0
      %p196 = por %p194, %p195
      %p197 = scmp.ne.s32.totalorder %s185, %s186
      %p198 = scmp.eq.s32.totalorder %s22, 1
      %p199 = por %p197, %p198
      %p201 = scmp.ne.s32.totalorder %s186, %s200
      %p202 = scmp.eq.s32.totalorder %s22, 0
      %p203 = por %p201, %p202
      %s204 = ssub.s32 %s23, %s35
      %s205 = ssub.s32 %s24, %s31
      %s206 = sor.u32 %s204, %s205
      %p207 = scmp.eq.s32.totalorder %s206, 0
      %s209 = sadd.s32 %s208, 1
      %s210 = scalar_select %p207, %s208, %s209
      %p213 = pneg %p207
      %p214 = scmp.eq.s32.totalorder %s16, 1
      %p215 = por %p213, %p214
      %p216 = scmp.ne.s32.totalorder %s208, %s211
      %p217 = scmp.eq.s32.totalorder %s16, 0
      %p218 = por %p216, %p217
      %p219 = scmp.ne.s32.totalorder %s208, %s211
      %p220 = scmp.eq.s32.totalorder %s21, 1
      %p221 = por %p219, %p220
      %p222 = scmp.ne.s32.totalorder %s211, %s212
      %p223 = scmp.eq.s32.totalorder %s21, 0
      %p224 = por %p222, %p223
      %p225 = scmp.ne.s32.totalorder %s211, %s212
      %p226 = scmp.eq.s32.totalorder %s22, 1
      %p227 = por %p225, %p226
      %p229 = scmp.ne.s32.totalorder %s212, %s228
      %p230 = scmp.eq.s32.totalorder %s22, 0
      %p231 = por %p229, %p230
      %p232 = scmp.le.s32.totalorder 1, %s16
      %p233 = scmp.lt.s32.totalorder %s16, 3
      %p234 = pnand %p232, %p233
      %p235 = pneg %p234
      // Predicated region
      $region9: #{tpu_custom_call.1} parent=5 // pred_check
        _
      $region10: #{tpu_custom_call.1} parent=5 // pred_check_branch
        %237 = sbr.rel (%p234) target = $region12
      $region11: #{tpu_custom_call.1} parent=5 // pred_region
        %s238 = ssub.s32 %s16, 1
        // Predicated region
        $region13: #{tpu_custom_call.1} parent=11 // pred_check
          %p239 = pneg %p133
        $region14: #{tpu_custom_call.1} parent=11 // pred_check_branch
          %241 = sbr.rel (%p239) target = $region16
        $region15: #{tpu_custom_call.1} parent=11 // pred_region
          _
        $region16: #{tpu_custom_call.1} parent=11 // pred_fallthru
          _
        // Predicated region
        $region17: #{tpu_custom_call.1} parent=11 // pred_check
          %p242 = pneg %p154
        $region18: #{tpu_custom_call.1} parent=11 // pred_check_branch
          %244 = sbr.rel (%p242) target = $region20
        $region19: #{tpu_custom_call.1} parent=11 // pred_region
          _
        $region20: #{tpu_custom_call.1} parent=11 // pred_fallthru
          _
        // Predicated region
        $region21: #{tpu_custom_call.1} parent=11 // pred_check
          %p245 = pneg %p175
        $region22: #{tpu_custom_call.1} parent=11 // pred_check_branch
          %247 = sbr.rel (%p245) target = $region24
        $region23: #{tpu_custom_call.1} parent=11 // pred_region
          _
        $region24: #{tpu_custom_call.1} parent=11 // pred_fallthru
          _
        // Predicated region
        $region25: #{tpu_custom_call.1} parent=11 // pred_check
          %p248 = pneg %p196
        $region26: #{tpu_custom_call.1} parent=11 // pred_check_branch
          %250 = sbr.rel (%p248) target = $region28
        $region27: #{tpu_custom_call.1} parent=11 // pred_region
          _
        $region28: #{tpu_custom_call.1} parent=11 // pred_fallthru
          _
      $region12: #{tpu_custom_call.1} parent=5 // pred_fallthru
        _
      %p251 = scmp.lt.s32.totalorder %s16, 2
      // Predicated region
      $region29: #{tpu_custom_call.1} parent=5 // pred_check
        %p252 = pneg %p251
      $region30: #{tpu_custom_call.1} parent=5 // pred_check_branch
        %254 = sbr.rel (%p252) target = $region32
      $region31: #{tpu_custom_call.1} parent=5 // pred_region
        // Predicated region
        $region33: #{tpu_custom_call.1} parent=31 // pred_check
          %p255 = pneg %p50
        $region34: #{tpu_custom_call.1} parent=31 // pred_check_branch
          %257 = sbr.rel (%p255) target = $region36
        $region35: #{tpu_custom_call.1} parent=31 // pred_region
          %s258 = smul.u32 2, %s24
          %p259 = scmp.lt.s32.totalorder %s23, 1
          %s260 = scalar_select %p259, %s23, 1
          %p261 = scmp.lt.s32.totalorder %s258, 1
          %s262 = scalar_select %p261, %s258, 1
          %s263 = smul.addr %s260, 2
          %s264 = sadd.s32 %s262, %s263
          %s265 = smul.addr %s264, 4
          %s266 = scalar_lea.vmem %s0, %s265
          %s267 = smul.u32 2, %s24
        $region36: #{tpu_custom_call.1} parent=31 // pred_fallthru
          _
        // Predicated region
        $region37: #{tpu_custom_call.1} parent=31 // pred_check
          %p268 = pneg %p78
        $region38: #{tpu_custom_call.1} parent=31 // pred_check_branch
          %270 = sbr.rel (%p268) target = $region40
        $region39: #{tpu_custom_call.1} parent=31 // pred_region
          %s271 = smul.u32 2, %s24
          %p272 = scmp.lt.s32.totalorder %s23, 1
          %s273 = scalar_select %p272, %s23, 1
          %p274 = scmp.lt.s32.totalorder %s271, 1
          %s275 = scalar_select %p274, %s271, 1
          %s276 = smul.addr %s273, 2
          %s277 = sadd.s32 %s275, %s276
          %s278 = smul.addr %s277, 8
          %s279 = scalar_lea.vmem %s1, %s278
          %s280 = smul.u32 2, %s24
        $region40: #{tpu_custom_call.1} parent=31 // pred_fallthru
          _
        // Predicated region
        $region41: #{tpu_custom_call.1} parent=31 // pred_check
          %p281 = pneg %p106
        $region42: #{tpu_custom_call.1} parent=31 // pred_check_branch
          %283 = sbr.rel (%p281) target = $region44
        $region43: #{tpu_custom_call.1} parent=31 // pred_region
          %s284 = smul.u32 2, %s24
          %p285 = scmp.lt.s32.totalorder %s23, 1
          %s286 = scalar_select %p285, %s23, 1
          %p287 = scmp.lt.s32.totalorder %s284, 1
          %s288 = scalar_select %p287, %s284, 1
          %s289 = smul.addr %s286, 4
          %s290 = sadd.s32 %s288, %s289
          %s291 = smul.addr %s290, 8
          %s292 = scalar_lea.vmem %s2, %s291
          %s293 = smul.u32 2, %s24
        $region44: #{tpu_custom_call.1} parent=31 // pred_fallthru
          _
      $region32: #{tpu_custom_call.1} parent=5 // pred_fallthru
        _
      %p294 = scmp.le.s32.totalorder 1, %s16
      %p295 = scmp.lt.s32.totalorder %s16, 3
      %p296 = pnand %p294, %p295
      %p297 = pneg %p296
      // Predicated region
      $region45: #{tpu_custom_call.1} parent=5 // pred_check
        _
      $region46: #{tpu_custom_call.1} parent=5 // pred_check_branch
        %299 = sbr.rel (%p296) target = $region48
      $region47: #{tpu_custom_call.1} parent=5 // pred_region
        %s300 = ssub.s32 %s16, 1
        %s301 = smul.u32 2, %s26
        %p302 = scmp.lt.s32.totalorder %s25, 1
        %s303 = scalar_select %p302, %s25, 1
        %p304 = scmp.lt.s32.totalorder %s301, 1
        %s305 = scalar_select %p304, %s301, 1
        %s306 = smul.addr %s303, 2
        %s307 = sadd.s32 %s305, %s306
        %s308 = smul.addr %s307, 4
        %s309 = scalar_lea.vmem %s0, %s308
        %p310 = pneg %p56
        %p311 = pneg %p53
        %s312 = smul.u32 2, %s26
        %p313 = scmp.lt.s32.totalorder %s25, 1
        %s314 = scalar_select %p313, %s25, 1
        %p315 = scmp.lt.s32.totalorder %s312, 1
        %s316 = scalar_select %p315, %s312, 1
        %s317 = smul.addr %s314, 2
        %s318 = sadd.s32 %s316, %s317
        %s319 = smul.addr %s318, 8
        %s320 = scalar_lea.vmem %s1, %s319
        %p321 = pneg %p84
        %p322 = pneg %p81
        %s323 = smul.u32 2, %s26
        %p324 = scmp.lt.s32.totalorder %s25, 1
        %s325 = scalar_select %p324, %s25, 1
        %p326 = scmp.lt.s32.totalorder %s323, 1
        %s327 = scalar_select %p326, %s323, 1
        %s328 = smul.addr %s325, 4
        %s329 = sadd.s32 %s327, %s328
        %s330 = smul.addr %s329, 8
        %s331 = scalar_lea.vmem %s2, %s330
        %p332 = pneg %p112
        %p333 = pneg %p109
        %p334 = pneg %p133
        %p335 = pneg %p130
        %p336 = pneg %p154
        %p337 = pneg %p151
        %p338 = pneg %p175
        %p339 = pneg %p172
        %p340 = pneg %p196
        %p341 = pneg %p193
        %p342 = pneg %p224
        %p343 = pneg %p221
        %s344 = sand.u32 %s211, 1
        %s345 = scalar_lea.sflag [#allocation3], %s344
        %s346 = sand.u32 %s211, 1
        %s347 = smul.addr %s346, 128
        %s348 = scalar_lea.vmem [#allocation2], %s347
        %s349 = smul.u32 2, %s26
        %p350 = scmp.lt.s32.totalorder %s25, 1
        %s351 = scalar_select %p350, %s25, 1
        %p352 = scmp.lt.s32.totalorder %s349, 1
        %s353 = scalar_select %p352, %s349, 1
        %s354 = smul.addr %s351, 2
        %s355 = sadd.s32 %s353, %s354
        %s356 = smul.addr %s355, 4
        %s357 = scalar_lea.vmem %s0, %s356
        %s358 = smul.u32 2, %s26
        %s359 = smul.u32 2, %s26
        %p360 = scmp.lt.s32.totalorder %s25, 1
        %s361 = scalar_select %p360, %s25, 1
        %p362 = scmp.lt.s32.totalorder %s359, 1
        %s363 = scalar_select %p362, %s359, 1
        %s364 = smul.addr %s361, 2
        %s365 = sadd.s32 %s363, %s364
        %s366 = smul.addr %s365, 8
        %s367 = scalar_lea.vmem %s1, %s366
        %s368 = smul.u32 2, %s26
        %s369 = smul.u32 2, %s26
        %p370 = scmp.lt.s32.totalorder %s25, 1
        %s371 = scalar_select %p370, %s25, 1
        %p372 = scmp.lt.s32.totalorder %s369, 1
        %s373 = scalar_select %p372, %s369, 1
        %s374 = smul.addr %s371, 4
        %s375 = sadd.s32 %s373, %s374
        %s376 = smul.addr %s375, 8
        %s377 = scalar_lea.vmem %s2, %s376
        %s378 = smul.u32 2, %s26
        %s379 = smul.u32 2, %s26
        %v380 = vld [vmem:[%s3] sm:$0xff]
        %v381 = vld [vmem:[%s3 + $0x8] sm:$0xff]
        %v382 = vld [vmem:[%s3 + $0x10] sm:$0xff]
        %v383 = vld [vmem:[%s3 + $0x18] sm:$0xff]
        %v384 = vld [vmem:[%s3 + $0x20] sm:$0xff]
        %v385 = vld [vmem:[%s3 + $0x28] sm:$0xff]
        %v386 = vld [vmem:[%s3 + $0x30] sm:$0xff]
        %v387 = vld [vmem:[%s3 + $0x38] sm:$0xff]
        %v388 = vld [vmem:[%s357] sm:$0xff]
        %v389 = vld [vmem:[%s4] sm:$0xff]
        %v390 = vld [vmem:[%s4 + $0x8] sm:$0xff]
        %v391 = vld [vmem:[%s4 + $0x10] sm:$0xff]
        %v392 = vld [vmem:[%s4 + $0x18] sm:$0xff]
        %v393 = vld [vmem:[%s4 + $0x20] sm:$0xff]
        %v394 = vld [vmem:[%s4 + $0x28] sm:$0xff]
        %v395 = vld [vmem:[%s4 + $0x30] sm:$0xff]
        %v396 = vld [vmem:[%s4 + $0x38] sm:$0xff]
        %v397 = vld [vmem:[%s367] sm:$0xff]
        %v398 = vld [vmem:[%s367 + $0x8] sm:$0xff]
        %vm399 = vcmask 64512
        %v401 = vsel %vm399, %v389, 0
        %v404 = vsel %vm399, %v390, 0
        %v407 = vsel %vm399, %v391, 0
        %v410 = vsel %vm399, %v392, 0
        %v413 = vsel %vm399, %v393, 0
        %v416 = vsel %vm399, %v394, 0
        %v419 = vsel %vm399, %v395, 0
        %v422 = vsel %vm399, %v396, 0
        %424 = vmatprep.subr.mxu0 %v398
        %425 = vmatpush1.msra.mxu0 %v397
        %426 = vmatprep.subr.mxu0 0.0
        %427 = vmatpush1.msra.mxu0 0.0
        %428 = vmatprep.subr.mxu0 0.0
        %429 = vmatpush1.msra.mxu0 0.0
        %430 = vmatprep.subr.mxu0 0.0
        %431 = vmatpush1.msra.mxu0 0.0
        %432 = vmatprep.subr.mxu0 0.0
        %433 = vmatpush1.msra.mxu0 0.0
        %434 = vmatprep.subr.mxu0 0.0
        %435 = vmatpush1.msra.mxu0 0.0
        %436 = vmatprep.subr.mxu0 0.0
        %437 = vmatpush1.msra.mxu0 0.0
        %438 = vmatprep.subr.mxu0 0.0
        %439 = vmatpush1.msra.mxu0 0.0
        %440 = vmatprep.subr.mxu0 0.0
        %441 = vmatpush1.msra.mxu0 0.0
        %442 = vmatprep.subr.mxu0 0.0
        %443 = vmatpush1.msra.mxu0 0.0
        %444 = vmatprep.subr.mxu0 0.0
        %445 = vmatpush1.msra.mxu0 0.0
        %446 = vmatprep.subr.mxu0 0.0
        %447 = vmatpush1.msra.mxu0 0.0
        %448 = vmatprep.subr.mxu0 0.0
        %449 = vmatpush1.msra.mxu0 0.0
        %450 = vmatprep.subr.mxu0 0.0
        %451 = vmatpush1.msra.mxu0 0.0
        %452 = vmatprep.subr.mxu0 0.0
        %453 = vmatpush1.msra.mxu0 0.0
        %454 = vmatprep.subr.mxu0 0.0
        %455 = vmatpush1.msra.mxu0 0.0
        %456 = vmatprep.subr.mxu0 0.0
        %457 = vmatpush1.msra.mxu0 0.0
        %458 = vmatprep.subr.mxu0 0.0
        %459 = vmatpush1.msra.mxu0 0.0
        %460 = vmatprep.subr.mxu0 0.0
        %461 = vmatpush1.msra.mxu0 0.0
        %462 = vmatprep.subr.mxu0 0.0
        %463 = vmatpush1.msra.mxu0 0.0
        %464 = vmatprep.subr.mxu0 0.0
        %465 = vmatpush1.msra.mxu0 0.0
        %466 = vmatprep.subr.mxu0 0.0
        %467 = vmatpush1.msra.mxu0 0.0
        %468 = vmatprep.subr.mxu0 0.0
        %469 = vmatpush1.msra.mxu0 0.0
        %470 = vmatprep.subr.mxu0 0.0
        %471 = vmatpush1.msra.mxu0 0.0
        %472 = vmatprep.subr.mxu0 0.0
        %473 = vmatpush1.msra.mxu0 0.0
        %474 = vmatprep.subr.mxu0 0.0
        %475 = vmatpush1.msra.mxu0 0.0
        %476 = vmatprep.subr.mxu0 0.0
        %477 = vmatpush1.msra.mxu0 0.0
        %478 = vmatprep.subr.mxu0 0.0
        %479 = vmatpush1.msra.mxu0 0.0
        %480 = vmatprep.subr.mxu0 0.0
        %481 = vmatpush1.msra.mxu0 0.0
        %482 = vmatprep.subr.mxu0 0.0
        %483 = vmatpush1.msra.mxu0 0.0
        %484 = vmatprep.subr.mxu0 0.0
        %485 = vmatpush1.msra.mxu0 0.0
        %486 = vmatprep.subr.mxu0 0.0
        %487 = vmatpush1.msra.mxu0 0.0
        %488 = vmatprep.mubr.f32.mxu0 0.0
        %489 = vmatmul.mubr.f32.gmra.mrb[0].mxu0 %v401
        %v490 = vpop.f32.mrb[0].mxu0
        %v491 = vadd.f32 0.0, %v490
        %v492 = vpop.f32.mrb[0].mxu0
        %v493 = vadd.f32 0.0, %v492
        %494 = vmatprep.mubr.f32.mxu0 0.0
        %495 = vmatmul.mubr.f32.gmra.mrb[0].mxu0 %v404
        %v496 = vpop.f32.mrb[0].mxu0
        %v497 = vadd.f32 0.0, %v496
        %v498 = vpop.f32.mrb[0].mxu0
        %v499 = vadd.f32 0.0, %v498
        %500 = vmatprep.mubr.f32.mxu0 0.0
        %501 = vmatmul.mubr.f32.gmra.mrb[0].mxu0 %v407
        %v502 = vpop.f32.mrb[0].mxu0
        %v503 = vadd.f32 0.0, %v502
        %v504 = vpop.f32.mrb[0].mxu0
        %v505 = vadd.f32 0.0, %v504
        %506 = vmatprep.mubr.f32.mxu0 0.0
        %507 = vmatmul.mubr.f32.gmra.mrb[0].mxu0 %v410
        %v508 = vpop.f32.mrb[0].mxu0
        %v509 = vadd.f32 0.0, %v508
        %v510 = vpop.f32.mrb[0].mxu0
        %v511 = vadd.f32 0.0, %v510
        %512 = vmatprep.mubr.f32.mxu0 0.0
        %513 = vmatmul.mubr.f32.gmra.mrb[0].mxu0 %v413
        %v514 = vpop.f32.mrb[0].mxu0
        %v515 = vadd.f32 0.0, %v514
        %v516 = vpop.f32.mrb[0].mxu0
        %v517 = vadd.f32 0.0, %v516
        %518 = vmatprep.mubr.f32.mxu0 0.0
        %519 = vmatmul.mubr.f32.gmra.mrb[0].mxu0 %v416
        %v520 = vpop.f32.mrb[0].mxu0
        %v521 = vadd.f32 0.0, %v520
        %v522 = vpop.f32.mrb[0].mxu0
        %v523 = vadd.f32 0.0, %v522
        %524 = vmatprep.mubr.f32.mxu0 0.0
        %525 = vmatmul.mubr.f32.gmra.mrb[0].mxu0 %v419
        %v526 = vpop.f32.mrb[0].mxu0
        %v527 = vadd.f32 0.0, %v526
        %v528 = vpop.f32.mrb[0].mxu0
        %v529 = vadd.f32 0.0, %v528
        %530 = vmatprep.mubr.f32.mxu0 0.0
        %531 = vmatmul.mubr.f32.gmra.mrb[0].mxu0 %v422
        %v532 = vpop.f32.mrb[0].mxu0
        %v533 = vadd.f32 0.0, %v532
        %v534 = vpop.f32.mrb[0].mxu0
        %v535 = vadd.f32 0.0, %v534
        %536 = vdwg.mxu0
        %v538 = vcombine.high %v388, %v388
        %vm539 = vcmask 31744
        %v541 = vsel %vm539, %v380, 0
        %v544 = vsel %vm539, %v381, 0
        %v547 = vsel %vm539, %v382, 0
        %v550 = vsel %vm539, %v383, 0
        %v553 = vsel %vm539, %v384, 0
        %v556 = vsel %vm539, %v385, 0
        %v559 = vsel %vm539, %v386, 0
        %v562 = vsel %vm539, %v387, 0
        %vm564 = vcmask 1043456
        %v565 = vsel %vm564, %v388, 0
        %v567 = vsel %vm564, %v538, 0
        %569 = vmatprep.subr.mxu0 %v567
        %570 = vmatpush1.msra.mxu0 %v565
        %571 = vmatprep.subr.mxu0 0.0
        %572 = vmatpush1.msra.mxu0 0.0
        %573 = vmatprep.subr.mxu0 0.0
        %574 = vmatpush1.msra.mxu0 0.0
        %575 = vmatprep.subr.mxu0 0.0
        %576 = vmatpush1.msra.mxu0 0.0
        %577 = vmatprep.subr.mxu0 0.0
        %578 = vmatpush1.msra.mxu0 0.0
        %579 = vmatprep.subr.mxu0 0.0
        %580 = vmatpush1.msra.mxu0 0.0
        %581 = vmatprep.subr.mxu0 0.0
        %582 = vmatpush1.msra.mxu0 0.0
        %583 = vmatprep.subr.mxu0 0.0
        %584 = vmatpush1.msra.mxu0 0.0
        %585 = vmatprep.subr.mxu0 0.0
        %586 = vmatpush1.msra.mxu0 0.0
        %587 = vmatprep.subr.mxu0 0.0
        %588 = vmatpush1.msra.mxu0 0.0
        %589 = vmatprep.subr.mxu0 0.0
        %590 = vmatpush1.msra.mxu0 0.0
        %591 = vmatprep.subr.mxu0 0.0
        %592 = vmatpush1.msra.mxu0 0.0
        %593 = vmatprep.subr.mxu0 0.0
        %594 = vmatpush1.msra.mxu0 0.0
        %595 = vmatprep.subr.mxu0 0.0
        %596 = vmatpush1.msra.mxu0 0.0
        %597 = vmatprep.subr.mxu0 0.0
        %598 = vmatpush1.msra.mxu0 0.0
        %599 = vmatprep.subr.mxu0 0.0
        %600 = vmatpush1.msra.mxu0 0.0
        %601 = vmatprep.subr.mxu0 0.0
        %602 = vmatpush1.msra.mxu0 0.0
        %603 = vmatprep.subr.mxu0 0.0
        %604 = vmatpush1.msra.mxu0 0.0
        %605 = vmatprep.subr.mxu0 0.0
        %606 = vmatpush1.msra.mxu0 0.0
        %607 = vmatprep.subr.mxu0 0.0
        %608 = vmatpush1.msra.mxu0 0.0
        %609 = vmatprep.subr.mxu0 0.0
        %610 = vmatpush1.msra.mxu0 0.0
        %611 = vmatprep.subr.mxu0 0.0
        %612 = vmatpush1.msra.mxu0 0.0
        %613 = vmatprep.subr.mxu0 0.0
        %614 = vmatpush1.msra.mxu0 0.0
        %615 = vmatprep.subr.mxu0 0.0
        %616 = vmatpush1.msra.mxu0 0.0
        %617 = vmatprep.subr.mxu0 0.0
        %618 = vmatpush1.msra.mxu0 0.0
        %619 = vmatprep.subr.mxu0 0.0
        %620 = vmatpush1.msra.mxu0 0.0
        %621 = vmatprep.subr.mxu0 0.0
        %622 = vmatpush1.msra.mxu0 0.0
        %623 = vmatprep.subr.mxu0 0.0
        %624 = vmatpush1.msra.mxu0 0.0
        %625 = vmatprep.subr.mxu0 0.0
        %626 = vmatpush1.msra.mxu0 0.0
        %627 = vmatprep.subr.mxu0 0.0
        %628 = vmatpush1.msra.mxu0 0.0
        %629 = vmatprep.subr.mxu0 0.0
        %630 = vmatpush1.msra.mxu0 0.0
        %631 = vmatprep.subr.mxu0 0.0
        %632 = vmatpush1.msra.mxu0 0.0
        %633 = vmatprep.mubr.f32.mxu0 0.0
        %634 = vmatmul.mubr.f32.gmra.mrb[0].mxu0 %v541
        %v635 = vpop.f32.mrb[0].mxu0
        %v636 = vadd.f32 %v491, %v635
        %v637 = vpop.f32.mrb[0].mxu0
        %v638 = vadd.f32 %v493, %v637
        %639 = vmatprep.mubr.f32.mxu0 0.0
        %640 = vmatmul.mubr.f32.gmra.mrb[0].mxu0 %v544
        %v641 = vpop.f32.mrb[0].mxu0
        %v642 = vadd.f32 %v497, %v641
        %v643 = vpop.f32.mrb[0].mxu0
        %v644 = vadd.f32 %v499, %v643
        %645 = vmatprep.mubr.f32.mxu0 0.0
        %646 = vmatmul.mubr.f32.gmra.mrb[0].mxu0 %v547
        %v647 = vpop.f32.mrb[0].mxu0
        %v648 = vadd.f32 %v503, %v647
        %v649 = vpop.f32.mrb[0].mxu0
        %v650 = vadd.f32 %v505, %v649
        %651 = vmatprep.mubr.f32.mxu0 0.0
        %652 = vmatmul.mubr.f32.gmra.mrb[0].mxu0 %v550
        %v653 = vpop.f32.mrb[0].mxu0
        %v654 = vadd.f32 %v509, %v653
        %v655 = vpop.f32.mrb[0].mxu0
        %v656 = vadd.f32 %v511, %v655
        %657 = vmatprep.mubr.f32.mxu0 0.0
        %658 = vmatmul.mubr.f32.gmra.mrb[0].mxu0 %v553
        %v659 = vpop.f32.mrb[0].mxu0
        %v660 = vadd.f32 %v515, %v659
        %v661 = vpop.f32.mrb[0].mxu0
        %v662 = vadd.f32 %v517, %v661
        %663 = vmatprep.mubr.f32.mxu0 0.0
        %664 = vmatmul.mubr.f32.gmra.mrb[0].mxu0 %v556
        %v665 = vpop.f32.mrb[0].mxu0
        %v666 = vadd.f32 %v521, %v665
        %v667 = vpop.f32.mrb[0].mxu0
        %v668 = vadd.f32 %v523, %v667
        %669 = vmatprep.mubr.f32.mxu0 0.0
        %670 = vmatmul.mubr.f32.gmra.mrb[0].mxu0 %v559
        %v671 = vpop.f32.mrb[0].mxu0
        %v672 = vadd.f32 %v527, %v671
        %v673 = vpop.f32.mrb[0].mxu0
        %v674 = vadd.f32 %v529, %v673
        %675 = vmatprep.mubr.f32.mxu0 0.0
        %676 = vmatmul.mubr.f32.gmra.mrb[0].mxu0 %v562
        %v677 = vpop.f32.mrb[0].mxu0
        %v678 = vadd.f32 %v533, %v677
        %v679 = vpop.f32.mrb[0].mxu0
        %v680 = vadd.f32 %v535, %v679
        %681 = vdwg.mxu0
        %v682 = vld [vmem:[%s5] sm:$0xff]
        %v683 = vld [vmem:[%s5 + $0x8] sm:$0xff]
        %v684 = vld [vmem:[%s5 + $0x10] sm:$0xff]
        %v685 = vld [vmem:[%s5 + $0x18] sm:$0xff]
        %v686 = vld [vmem:[%s5 + $0x20] sm:$0xff]
        %v687 = vld [vmem:[%s5 + $0x28] sm:$0xff]
        %v688 = vld [vmem:[%s5 + $0x30] sm:$0xff]
        %v689 = vld [vmem:[%s5 + $0x38] sm:$0xff]
        %v690 = vld [vmem:[%s377] sm:$0xff]
        %v691 = vld [vmem:[%s377 + $0x8] sm:$0xff]
        %v692 = vld [vmem:[%s377 + $0x10] sm:$0xff]
        %v693 = vld [vmem:[%s377 + $0x18] sm:$0xff]
        %vm694 = vcmask 130048
        %v696 = vsel %vm694, %v682, 0
        %v699 = vsel %vm694, %v683, 0
        %v702 = vsel %vm694, %v684, 0
        %v705 = vsel %vm694, %v685, 0
        %v708 = vsel %vm694, %v686, 0
        %v711 = vsel %vm694, %v687, 0
        %v714 = vsel %vm694, %v688, 0
        %v717 = vsel %vm694, %v689, 0
        %719 = vmatprep.subr.mxu0 %v691
        %720 = vmatpush1.msra.mxu0 %v690
        %721 = vmatprep.subr.mxu0 %v693
        %722 = vmatpush1.msra.mxu0 %v692
        %723 = vmatprep.subr.mxu0 0.0
        %724 = vmatpush1.msra.mxu0 0.0
        %725 = vmatprep.subr.mxu0 0.0
        %726 = vmatpush1.msra.mxu0 0.0
        %727 = vmatprep.subr.mxu0 0.0
        %728 = vmatpush1.msra.mxu0 0.0
        %729 = vmatprep.subr.mxu0 0.0
        %730 = vmatpush1.msra.mxu0 0.0
        %731 = vmatprep.subr.mxu0 0.0
        %732 = vmatpush1.msra.mxu0 0.0
        %733 = vmatprep.subr.mxu0 0.0
        %734 = vmatpush1.msra.mxu0 0.0
        %735 = vmatprep.subr.mxu0 0.0
        %736 = vmatpush1.msra.mxu0 0.0
        %737 = vmatprep.subr.mxu0 0.0
        %738 = vmatpush1.msra.mxu0 0.0
        %739 = vmatprep.subr.mxu0 0.0
        %740 = vmatpush1.msra.mxu0 0.0
        %741 = vmatprep.subr.mxu0 0.0
        %742 = vmatpush1.msra.mxu0 0.0
        %743 = vmatprep.subr.mxu0 0.0
        %744 = vmatpush1.msra.mxu0 0.0
        %745 = vmatprep.subr.mxu0 0.0
        %746 = vmatpush1.msra.mxu0 0.0
        %747 = vmatprep.subr.mxu0 0.0
        %748 = vmatpush1.msra.mxu0 0.0
        %749 = vmatprep.subr.mxu0 0.0
        %750 = vmatpush1.msra.mxu0 0.0
        %751 = vmatprep.subr.mxu0 0.0
        %752 = vmatpush1.msra.mxu0 0.0
        %753 = vmatprep.subr.mxu0 0.0
        %754 = vmatpush1.msra.mxu0 0.0
        %755 = vmatprep.subr.mxu0 0.0
        %756 = vmatpush1.msra.mxu0 0.0
        %757 = vmatprep.subr.mxu0 0.0
        %758 = vmatpush1.msra.mxu0 0.0
        %759 = vmatprep.subr.mxu0 0.0
        %760 = vmatpush1.msra.mxu0 0.0
        %761 = vmatprep.subr.mxu0 0.0
        %762 = vmatpush1.msra.mxu0 0.0
        %763 = vmatprep.subr.mxu0 0.0
        %764 = vmatpush1.msra.mxu0 0.0
        %765 = vmatprep.subr.mxu0 0.0
        %766 = vmatpush1.msra.mxu0 0.0
        %767 = vmatprep.subr.mxu0 0.0
        %768 = vmatpush1.msra.mxu0 0.0
        %769 = vmatprep.subr.mxu0 0.0
        %770 = vmatpush1.msra.mxu0 0.0
        %771 = vmatprep.subr.mxu0 0.0
        %772 = vmatpush1.msra.mxu0 0.0
        %773 = vmatprep.subr.mxu0 0.0
        %774 = vmatpush1.msra.mxu0 0.0
        %775 = vmatprep.subr.mxu0 0.0
        %776 = vmatpush1.msra.mxu0 0.0
        %777 = vmatprep.subr.mxu0 0.0
        %778 = vmatpush1.msra.mxu0 0.0
        %779 = vmatprep.subr.mxu0 0.0
        %780 = vmatpush1.msra.mxu0 0.0
        %781 = vmatprep.subr.mxu0 0.0
        %782 = vmatpush1.msra.mxu0 0.0
        %783 = vmatprep.mubr.f32.mxu0 0.0
        %784 = vmatmul.mubr.f32.gmra.mrb[0].mxu0 %v696
        %v785 = vpop.f32.mrb[0].mxu0
        %v786 = vadd.f32 0.0, %v785
        %v787 = vpop.f32.mrb[0].mxu0
        %v788 = vadd.f32 0.0, %v787
        %789 = vmatprep.mubr.f32.mxu0 0.0
        %790 = vmatmul.mubr.f32.gmra.mrb[0].mxu0 %v699
        %v791 = vpop.f32.mrb[0].mxu0
        %v792 = vadd.f32 0.0, %v791
        %v793 = vpop.f32.mrb[0].mxu0
        %v794 = vadd.f32 0.0, %v793
        %795 = vmatprep.mubr.f32.mxu0 0.0
        %796 = vmatmul.mubr.f32.gmra.mrb[0].mxu0 %v702
        %v797 = vpop.f32.mrb[0].mxu0
        %v798 = vadd.f32 0.0, %v797
        %v799 = vpop.f32.mrb[0].mxu0
        %v800 = vadd.f32 0.0, %v799
        %801 = vmatprep.mubr.f32.mxu0 0.0
        %802 = vmatmul.mubr.f32.gmra.mrb[0].mxu0 %v705
        %v803 = vpop.f32.mrb[0].mxu0
        %v804 = vadd.f32 0.0, %v803
        %v805 = vpop.f32.mrb[0].mxu0
        %v806 = vadd.f32 0.0, %v805
        %807 = vmatprep.mubr.f32.mxu0 0.0
        %808 = vmatmul.mubr.f32.gmra.mrb[0].mxu0 %v708
        %v809 = vpop.f32.mrb[0].mxu0
        %v810 = vadd.f32 0.0, %v809
        %v811 = vpop.f32.mrb[0].mxu0
        %v812 = vadd.f32 0.0, %v811
        %813 = vmatprep.mubr.f32.mxu0 0.0
        %814 = vmatmul.mubr.f32.gmra.mrb[0].mxu0 %v711
        %v815 = vpop.f32.mrb[0].mxu0
        %v816 = vadd.f32 0.0, %v815
        %v817 = vpop.f32.mrb[0].mxu0
        %v818 = vadd.f32 0.0, %v817
        %819 = vmatprep.mubr.f32.mxu0 0.0
        %820 = vmatmul.mubr.f32.gmra.mrb[0].mxu0 %v714
        %v821 = vpop.f32.mrb[0].mxu0
        %v822 = vadd.f32 0.0, %v821
        %v823 = vpop.f32.mrb[0].mxu0
        %v824 = vadd.f32 0.0, %v823
        %825 = vmatprep.mubr.f32.mxu0 0.0
        %826 = vmatmul.mubr.f32.gmra.mrb[0].mxu0 %v717
        %v827 = vpop.f32.mrb[0].mxu0
        %v828 = vadd.f32 0.0, %v827
        %v829 = vpop.f32.mrb[0].mxu0
        %v830 = vadd.f32 0.0, %v829
        %831 = vdwg.mxu0
        %v832 = vadd.f32 %v636, %v786
        %v833 = vadd.f32 %v638, %v788
        %v834 = vadd.f32 %v642, %v792
        %v835 = vadd.f32 %v644, %v794
        %v836 = vadd.f32 %v648, %v798
        %v837 = vadd.f32 %v650, %v800
        %v838 = vadd.f32 %v654, %v804
        %v839 = vadd.f32 %v656, %v806
        %v840 = vadd.f32 %v660, %v810
        %v841 = vadd.f32 %v662, %v812
        %v842 = vadd.f32 %v666, %v816
        %v843 = vadd.f32 %v668, %v818
        %v844 = vadd.f32 %v672, %v822
        %v845 = vadd.f32 %v674, %v824
        %v846 = vadd.f32 %v678, %v828
        %v847 = vadd.f32 %v680, %v830
        %v848 = vld [vmem:[%s6] sm:$0xff]
        %v849 = vld [vmem:[%s6 + $0x8] sm:$0xff]
        %v850 = vld [vmem:[%s6 + $0x10] sm:$0xff]
        %v851 = vld [vmem:[%s6 + $0x18] sm:$0xff]
        %v852 = vld [vmem:[%s6 + $0x20] sm:$0xff]
        %v853 = vld [vmem:[%s6 + $0x28] sm:$0xff]
        %v854 = vld [vmem:[%s6 + $0x30] sm:$0xff]
        %v855 = vld [vmem:[%s6 + $0x38] sm:$0xff]
        %857 = vset.pattern.permute.xlu0 0
        %858 = vperm.xlu0 %857, %v848
        %v859 = vpop.permute.xlu0 %858
        %862 = vset.pattern.permute.xlu0 0
        %863 = vperm.xlu0 %862, %v849
        %v864 = vpop.permute.xlu0 %863
        %867 = vset.pattern.permute.xlu0 0
        %868 = vperm.xlu0 %867, %v850
        %v869 = vpop.permute.xlu0 %868
        %872 = vset.pattern.permute.xlu0 0
        %873 = vperm.xlu0 %872, %v851
        %v874 = vpop.permute.xlu0 %873
        %877 = vset.pattern.permute.xlu0 0
        %878 = vperm.xlu0 %877, %v852
        %v879 = vpop.permute.xlu0 %878
        %882 = vset.pattern.permute.xlu0 0
        %883 = vperm.xlu0 %882, %v853
        %v884 = vpop.permute.xlu0 %883
        %887 = vset.pattern.permute.xlu0 0
        %888 = vperm.xlu0 %887, %v854
        %v889 = vpop.permute.xlu0 %888
        %892 = vset.pattern.permute.xlu0 0
        %893 = vperm.xlu0 %892, %v855
        %v894 = vpop.permute.xlu0 %893
        %v896 = vadd.f32 %v832, %v859
        %v897 = vadd.f32 %v833, %v859
        %v898 = vadd.f32 %v834, %v864
        %v899 = vadd.f32 %v835, %v864
        %v900 = vadd.f32 %v836, %v869
        %v901 = vadd.f32 %v837, %v869
        %v902 = vadd.f32 %v838, %v874
        %v903 = vadd.f32 %v839, %v874
        %v904 = vadd.f32 %v840, %v879
        %v905 = vadd.f32 %v841, %v879
        %v906 = vadd.f32 %v842, %v884
        %v907 = vadd.f32 %v843, %v884
        %v908 = vadd.f32 %v844, %v889
        %v909 = vadd.f32 %v845, %v889
        %v910 = vadd.f32 %v846, %v894
        %v911 = vadd.f32 %v847, %v894
        %912 = vst [vmem:[%s348] sm:$0xff] %v896
        %913 = vst [vmem:[%s348 + $0x8] sm:$0xff] %v897
        %914 = vst [vmem:[%s348 + $0x10] sm:$0xff] %v898
        %915 = vst [vmem:[%s348 + $0x18] sm:$0xff] %v899
        %916 = vst [vmem:[%s348 + $0x20] sm:$0xff] %v900
        %917 = vst [vmem:[%s348 + $0x28] sm:$0xff] %v901
        %918 = vst [vmem:[%s348 + $0x30] sm:$0xff] %v902
        %919 = vst [vmem:[%s348 + $0x38] sm:$0xff] %v903
        %920 = vst [vmem:[%s348 + $0x40] sm:$0xff] %v904
        %921 = vst [vmem:[%s348 + $0x48] sm:$0xff] %v905
        %922 = vst [vmem:[%s348 + $0x50] sm:$0xff] %v906
        %923 = vst [vmem:[%s348 + $0x58] sm:$0xff] %v907
        %924 = vst [vmem:[%s348 + $0x60] sm:$0xff] %v908
        %925 = vst [vmem:[%s348 + $0x68] sm:$0xff] %v909
        %926 = vst [vmem:[%s348 + $0x70] sm:$0xff] %v910
        %927 = vst [vmem:[%s348 + $0x78] sm:$0xff] %v911
        %s928 = sand.u32 %s211, 1
        %s929 = scalar_lea.sflag [#allocation3], %s928
        %s930 = sand.u32 %s211, 1
        %s931 = smul.addr %s930, 128
        %s932 = scalar_lea.vmem [#allocation2], %s931
        // Predicated region
        $region49: #{tpu_custom_call.1} parent=47 // pred_check
          %p933 = pneg %p221
        $region50: #{tpu_custom_call.1} parent=47 // pred_check_branch
          %935 = sbr.rel (%p933) target = $region52
        $region51: #{tpu_custom_call.1} parent=47 // pred_region
          %s936 = smul.u32 2, %s26
          %s938 = ssub.s32 2048, 2048
          %939 = vsyncadd %s929, %s938
          %s940 = smul.addr %s25, 16
          %s941 = sadd.s32 %s936, %s940
          %s942 = smul.addr %s941, 128
          %s943 = scalar_lea.hbm %s7, %s942
          %s944 = sshll.u32 %s932, 4
          %s945 = int_to_ptr.vmem [resolvable:$true] %s944
          %950 = dma.vmem_to_hbm [thread:$0]  %s945, 2048, %s943, %s929, 256, 256, 16
        $region52: #{tpu_custom_call.1} parent=47 // pred_fallthru
          _
      $region48: #{tpu_custom_call.1} parent=5 // pred_fallthru
        _
      %p951 = scmp.le.s32.totalorder 2, %s16
      // Predicated region
      $region53: #{tpu_custom_call.1} parent=5 // pred_check
        %p952 = pneg %p951
      $region54: #{tpu_custom_call.1} parent=5 // pred_check_branch
        %954 = sbr.rel (%p952) target = $region56
      $region55: #{tpu_custom_call.1} parent=5 // pred_region
        %s955 = ssub.s32 %s16, 2
        // Predicated region
        $region57: #{tpu_custom_call.1} parent=55 // pred_check
          %p956 = pneg %p227
        $region58: #{tpu_custom_call.1} parent=55 // pred_check_branch
          %958 = sbr.rel (%p956) target = $region60
        $region59: #{tpu_custom_call.1} parent=55 // pred_region
          %s959 = sand.u32 %s212, 1
          %s960 = scalar_lea.sflag [#allocation3], %s959
          %s961 = sand.u32 %s212, 1
          %s962 = smul.addr %s961, 128
          %s963 = scalar_lea.vmem [#allocation2], %s962
          %964 = dma.done %s960, 2048
        $region60: #{tpu_custom_call.1} parent=55 // pred_fallthru
          _
      $region56: #{tpu_custom_call.1} parent=5 // pred_fallthru
        _
    $region6: #{tpu_custom_call.1} parent=1 // loop_footer
      %s20 = sadd.s32 1, %s16
    $region7: #{tpu_custom_call.1} parent=1 // loop_footer_branch
      %15 = sbr.rel target = $region3
    $region8: #{tpu_custom_call.1} parent=1 // loop_exit
      _
    %965 = vsyncpa [#allocation3], 1
    %s966 = scalar_lea.sflag [#allocation3], 1
    %967 = vsyncpa %s966, 1

</llo_original>
